<compile_context>
chip_gen: v5e
topology: v5e:2x2
jax: 0.10.0
libtpu: 0.0.40
codegen_flags: <defaults>
</compile_context>

<pallas_src>
import functools

import jax
import jax.numpy as jnp
import numpy as np
from jax.experimental import pallas as pl
from jax.experimental.pallas import tpu as pltpu

SMOOTH = 1e-5
_LANES = 128
_ROW_ALIGN = 32                    # worst-case sublane tile: f32=8, bf16=16, int8=32
_MAX_BLOCK_ROWS = 8192             # (8192,128) f32 block = 4 MiB per input
_VMEM_LIMIT_BYTES = 32 * 1024 * 1024   # explicit (> v5e 16 MiB scoped default)


def _dice_partial_kernel(x_ref, t_ref, out_ref, *, num_blocks, rem_last):
    """Per-block partial sums for the Dice loss.

    x_ref / t_ref: (block_rows, 128) VMEM tiles in their *native* dtypes.
    out_ref:       (1, 384) f32 = [ inter | sum(p) | sum(t) ] per-lane partials.
    """
    p = jax.nn.sigmoid(x_ref[...].astype(jnp.float32))
    t = t_ref[...].astype(jnp.float32)

    def _write(pv, tv):
        # Sublane (axis 0) reductions; the cross-lane reduce is done once in
        # the wrapper.  Single lane-dense (1, 384) output block per step.
        out_ref[:, 0:_LANES] = jnp.sum(pv * tv, axis=0, keepdims=True)
        out_ref[:, _LANES:2 * _LANES] = jnp.sum(pv, axis=0, keepdims=True)
        out_ref[:, 2 * _LANES:3 * _LANES] = jnp.sum(tv, axis=0, keepdims=True)

    is_last = pl.program_id(0) == (num_blocks - 1)

    @pl.when(jnp.logical_not(is_last))
    def _():                               # full blocks: unmasked fast path
        _write(p, t)

    @pl.when(is_last)
    def _():
        # Only the last block can contain host-pad zeros and/or stale rows of
        # a ragged block.  Block-local index -> no int32 overflow for huge
        # tensors (rem_last <= block_rows * 128).
        row = jax.lax.broadcasted_iota(jnp.int32, p.shape, 0)
        lane = jax.lax.broadcasted_iota(jnp.int32, p.shape, 1)
        valid = (row * _LANES + lane) < rem_last
        _write(jnp.where(valid, p, 0.0), jnp.where(valid, t, 0.0))


def dice_loss(inputs, targets, smooth=SMOOTH):
    """Binary Dice loss. `inputs` are logits, `targets` are {0,1}; any shape."""
    x = inputs.reshape(-1)                     # keep native dtype (bf16/f32/...)
    t = targets.reshape(-1)
    if t.dtype == jnp.bool_:
        t = t.astype(jnp.int8)                 # same byte width; VMEM-friendly
    n_valid = x.shape[0]

    # Tiny pad (< 4096 elements) so the row count is a multiple of the
    # worst-case sublane tile for all streamed dtypes; padded elements are
    # masked out in the last block, so values don't matter.
    tile = _ROW_ALIGN * _LANES
    pad = (-n_valid) % tile
    if pad:
        x = jnp.pad(x, (0, pad))
        t = jnp.pad(t, (0, pad))
    rows = (n_valid + pad) // _LANES           # multiple of _ROW_ALIGN
    x2 = x.reshape(rows, _LANES)
    t2 = t.reshape(rows, _LANES)

    block_rows = min(_MAX_BLOCK_ROWS, rows)
    # Keep >= 2 grid steps when the tensor allows it, so the "parallel" axis
    # can shard across both TensorCores on v7x.
    if block_rows == rows and rows >= 2 * _ROW_ALIGN:
        half = -(-rows // 2)                               # ceil(rows / 2)
        block_rows = -(-half // _ROW_ALIGN) * _ROW_ALIGN   # round up to align
    num_blocks = -(-rows // block_rows)        # ragged last block is masked
    # Valid elements remaining in the last block (Python ints -> no overflow).
    rem_last = n_valid - (num_blocks - 1) * block_rows * _LANES

    kernel = functools.partial(_dice_partial_kernel,
                               num_blocks=num_blocks, rem_last=rem_last)

    parts = pl.pallas_call(
        kernel,
        out_shape=jax.ShapeDtypeStruct((num_blocks, 3 * _LANES), jnp.float32),
        grid=(num_blocks,),
        in_specs=[
            pl.BlockSpec((block_rows, _LANES), lambda i: (i, 0)),
            pl.BlockSpec((block_rows, _LANES), lambda i: (i, 0)),
        ],
        out_specs=pl.BlockSpec((1, 3 * _LANES), lambda i: (i, 0)),
        compiler_params=pltpu.CompilerParams(
            dimension_semantics=("parallel",),
            vmem_limit_bytes=_VMEM_LIMIT_BYTES),
    )(x2, t2)

    # Tiny final combine (num_blocks x 128 values per sum) + dice formula.
    intersection = jnp.sum(parts[:, 0:_LANES])
    psum = jnp.sum(parts[:, _LANES:2 * _LANES])
    tsum = jnp.sum(parts[:, 2 * _LANES:3 * _LANES])
    return 1.0 - (2.0 * intersection + smooth) / (psum + tsum + smooth)


def _reference_dice_loss(inputs, targets, smooth=SMOOTH):
    # Pure-JAX mirror of the PyTorch DiceLoss.forward.
    p = jax.nn.sigmoid(inputs.astype(jnp.float32)).reshape(-1)
    t = targets.reshape(-1).astype(jnp.float32)
    inter = jnp.sum(p * t)
    union = jnp.sum(p) + jnp.sum(t)
    return 1.0 - (2.0 * inter + smooth) / (union + smooth)


if __name__ == "__main__":
    key = jax.random.PRNGKey(0)

    # Case 1: f32 logits + f32 {0,1} mask, tile-friendly small shape.
    k1, k2, k3, k4, k5, k6 = jax.random.split(key, 6)
    logits1 = jax.random.normal(k1, (2, 1, 16, 16), dtype=jnp.float32)
    target1 = (jax.random.uniform(k2, (2, 1, 16, 16)) > 0.5).astype(jnp.float32)
    out1 = dice_loss(logits1, target1)
    jax.block_until_ready(out1)
    np.testing.assert_allclose(np.asarray(out1),
                               np.asarray(_reference_dice_loss(logits1, target1)),
                               rtol=2e-5, atol=1e-6)

    # Case 2: native bf16 logits + bool mask, odd (non-tile-multiple) size.
    logits2 = jax.random.normal(k3, (2, 1, 17, 13), dtype=jnp.bfloat16)
    target2 = jax.random.uniform(k4, (2, 1, 17, 13)) > 0.5
    out2 = dice_loss(logits2, target2)
    jax.block_until_ready(out2)
    np.testing.assert_allclose(np.asarray(out2),
                               np.asarray(_reference_dice_loss(logits2, target2)),
                               rtol=2e-5, atol=1e-6)

    # Case 3: exercises >= 2 grid steps (fast path + masked last block).
    logits3 = jax.random.normal(k5, (2, 1, 64, 64), dtype=jnp.float32)
    target3 = (jax.random.uniform(k6, (2, 1, 64, 64)) > 0.5).astype(jnp.float32)
    out3 = dice_loss(logits3, target3)
    jax.block_until_ready(out3)
    np.testing.assert_allclose(np.asarray(out3),
                               np.asarray(_reference_dice_loss(logits3, target3)),
                               rtol=2e-5, atol=1e-6)

    print("KERNEL_OK")
</pallas_src>

<mosaic_0001>
module attributes {stable_mosaic.version = 11 : i64} {
  func.func @_dice_partial_kernel(%arg0: i32, %arg1: memref<32x128xf32, #tpu.memory_space<vmem>>, %arg2: memref<32x128xf32, #tpu.memory_space<vmem>>, %arg3: memref<1x384xf32, #tpu.memory_space<vmem>>) attributes {dimension_semantics = [#tpu.dimension_semantics<parallel>], iteration_bounds = array<i64: 1>, scalar_prefetch = 0 : i64, scratch_operands = 0 : i64, tpu.core_type = #tpu.core_type<tc>, window_params = [{transform_indices = @transform_0, window_bounds = array<i64: 32, 128>}, {transform_indices = @transform_1, window_bounds = array<i64: 32, 128>}, {transform_indices = @transform_2, window_bounds = array<i64: 1, 384>}]} {
    %c0 = arith.constant 0 : index
    %c0_0 = arith.constant 0 : index
    %0 = vector.load %arg1[%c0, %c0_0] : memref<32x128xf32, #tpu.memory_space<vmem>>, vector<32x128xf32>
    %1 = arith.negf %0 : vector<32x128xf32>
    %2 = math.exp %1 : vector<32x128xf32>
    %cst = arith.constant 1.000000e+00 : f32
    %3 = vector.broadcast %cst : f32 to vector<32x128xf32>
    %4 = arith.addf %3, %2 : vector<32x128xf32>
    %5 = arith.divf %3, %4 : vector<32x128xf32>
    %c0_1 = arith.constant 0 : index
    %c0_2 = arith.constant 0 : index
    %6 = vector.load %arg2[%c0_1, %c0_2] : memref<32x128xf32, #tpu.memory_space<vmem>>, vector<32x128xf32>
    %c0_i32 = arith.constant 0 : i32
    %7 = arith.cmpi eq, %arg0, %c0_i32 : i32
    %true = arith.constant true
    %8 = arith.xori %7, %true : i1
    %9 = arith.extui %8 : i1 to i32
    %c0_i32_3 = arith.constant 0 : i32
    %10 = arith.cmpi ne, %9, %c0_i32_3 : i32
    scf.if %10 {
      %13 = arith.mulf %5, %6 : vector<32x128xf32>
      %cst_5 = arith.constant dense<0.000000e+00> : vector<128xf32>
      %14 = vector.multi_reduction <add>, %13, %cst_5 [0] : vector<32x128xf32> to vector<128xf32>
      %15 = vector.shape_cast %14 : vector<128xf32> to vector<1x128xf32>
      %c0_6 = arith.constant 0 : index
      %c0_7 = arith.constant 0 : index
      %16 = vector.load %arg3[%c0_6, %c0_7] : memref<1x384xf32, #tpu.memory_space<vmem>>, vector<1x128xf32>
      tpu.vector_store %arg3[%c0_6, %c0_7], %15 {strides = array<i32>} : memref<1x384xf32, #tpu.memory_space<vmem>>, vector<1x128xf32>,
      %cst_8 = arith.constant dense<0.000000e+00> : vector<128xf32>
      %17 = vector.multi_reduction <add>, %5, %cst_8 [0] : vector<32x128xf32> to vector<128xf32>
      %18 = vector.shape_cast %17 : vector<128xf32> to vector<1x128xf32>
      %c0_9 = arith.constant 0 : index
      %c128 = arith.constant 128 : index
      %19 = vector.load %arg3[%c0_9, %c128] : memref<1x384xf32, #tpu.memory_space<vmem>>, vector<1x128xf32>
      tpu.vector_store %arg3[%c0_9, %c128], %18 {strides = array<i32>} : memref<1x384xf32, #tpu.memory_space<vmem>>, vector<1x128xf32>,
      %cst_10 = arith.constant dense<0.000000e+00> : vector<128xf32>
      %20 = vector.multi_reduction <add>, %6, %cst_10 [0] : vector<32x128xf32> to vector<128xf32>
      %21 = vector.shape_cast %20 : vector<128xf32> to vector<1x128xf32>
      %c0_11 = arith.constant 0 : index
      %c256 = arith.constant 256 : index
      %22 = vector.load %arg3[%c0_11, %c256] : memref<1x384xf32, #tpu.memory_space<vmem>>, vector<1x128xf32>
      tpu.vector_store %arg3[%c0_11, %c256], %21 {strides = array<i32>} : memref<1x384xf32, #tpu.memory_space<vmem>>, vector<1x128xf32>,
    } else {
    }
    %11 = arith.extui %7 : i1 to i32
    %c0_i32_4 = arith.constant 0 : i32
    %12 = arith.cmpi ne, %11, %c0_i32_4 : i32
    scf.if %12 {
      %13 = tpu.iota {dimensions = array<i32: 0>} : vector<32x128xi32>
      %14 = tpu.iota {dimensions = array<i32: 1>} : vector<32x128xi32>
      %c128_i32 = arith.constant 128 : i32
      %15 = vector.broadcast %c128_i32 : i32 to vector<32x128xi32>
      %16 = arith.muli %13, %15 : vector<32x128xi32>
      %17 = arith.addi %16, %14 : vector<32x128xi32>
      %c512_i32 = arith.constant 512 : i32
      %18 = vector.broadcast %c512_i32 : i32 to vector<32x128xi32>
      %19 = arith.cmpi slt, %17, %18 : vector<32x128xi32>
      %cst_5 = arith.constant 0.000000e+00 : f32
      %20 = vector.broadcast %cst_5 : f32 to vector<32x128xf32>
      %21 = arith.select %19, %5, %20 : vector<32x128xi1>, vector<32x128xf32>
      %cst_6 = arith.constant 0.000000e+00 : f32
      %22 = vector.broadcast %cst_6 : f32 to vector<32x128xf32>
      %23 = arith.select %19, %6, %22 : vector<32x128xi1>, vector<32x128xf32>
      %24 = arith.mulf %21, %23 : vector<32x128xf32>
      %cst_7 = arith.constant dense<0.000000e+00> : vector<128xf32>
      %25 = vector.multi_reduction <add>, %24, %cst_7 [0] : vector<32x128xf32> to vector<128xf32>
      %26 = vector.shape_cast %25 : vector<128xf32> to vector<1x128xf32>
      %c0_8 = arith.constant 0 : index
      %c0_9 = arith.constant 0 : index
      %27 = vector.load %arg3[%c0_8, %c0_9] : memref<1x384xf32, #tpu.memory_space<vmem>>, vector<1x128xf32>
      tpu.vector_store %arg3[%c0_8, %c0_9], %26 {strides = array<i32>} : memref<1x384xf32, #tpu.memory_space<vmem>>, vector<1x128xf32>,
      %cst_10 = arith.constant dense<0.000000e+00> : vector<128xf32>
      %28 = vector.multi_reduction <add>, %21, %cst_10 [0] : vector<32x128xf32> to vector<128xf32>
      %29 = vector.shape_cast %28 : vector<128xf32> to vector<1x128xf32>
      %c0_11 = arith.constant 0 : index
      %c128 = arith.constant 128 : index
      %30 = vector.load %arg3[%c0_11, %c128] : memref<1x384xf32, #tpu.memory_space<vmem>>, vector<1x128xf32>
      tpu.vector_store %arg3[%c0_11, %c128], %29 {strides = array<i32>} : memref<1x384xf32, #tpu.memory_space<vmem>>, vector<1x128xf32>,
      %cst_12 = arith.constant dense<0.000000e+00> : vector<128xf32>
      %31 = vector.multi_reduction <add>, %23, %cst_12 [0] : vector<32x128xf32> to vector<128xf32>
      %32 = vector.shape_cast %31 : vector<128xf32> to vector<1x128xf32>
      %c0_13 = arith.constant 0 : index
      %c256 = arith.constant 256 : index
      %33 = vector.load %arg3[%c0_13, %c256] : memref<1x384xf32, #tpu.memory_space<vmem>>, vector<1x128xf32>
      tpu.vector_store %arg3[%c0_13, %c256], %32 {strides = array<i32>} : memref<1x384xf32, #tpu.memory_space<vmem>>, vector<1x128xf32>,
    } else {
    }
    return
  }
  func.func @transform_0(%arg0: i32) -> (i32, i32) {
    %c0_i32 = arith.constant 0 : i32
    %c0_i32_0 = arith.constant 0 : i32
    return %arg0, %c0_i32 : i32, i32
  }
  func.func @transform_1(%arg0: i32) -> (i32, i32) {
    %c0_i32 = arith.constant 0 : i32
    %c0_i32_0 = arith.constant 0 : i32
    return %arg0, %c0_i32 : i32, i32
  }
  func.func @transform_2(%arg0: i32) -> (i32, i32) {
    %c0_i32 = arith.constant 0 : i32
    %c0_i32_0 = arith.constant 0 : i32
    return %arg0, %c0_i32 : i32, i32
  }
}

</mosaic_0001>

<llo_original>
// kernel: tpu_custom_call.1
$region0: #{tpu_custom_call.1}
  #allocation0 [shape = 'u32[]', space=smem, size = 0x4, offset = 0x4, fixed_abs, tag = 'smem constant byte address 0x4 - core index']
  #allocation1 [shape = 'u32[72,128]{1,0:T(1,128)}', space=vmem, size = 0x9000, scoped, tag = 'internal scratch']
  %s0 = inlined_call_operand.hbm [shape: f32[32,128], index: 0, kind: input, shape index: {}]
  %s1 = inlined_call_operand.hbm [shape: f32[32,128], index: 1, kind: input, shape index: {}]
  %s2 = inlined_call_operand.hbm [shape: f32[1,384], index: 2, kind: output, shape index: {}]
  %s3 = sld [smem:[#allocation0]]
  $region34: #{tpu_custom_call.1} parent=0
    _
  %s5 = ssub.s32 1, %s3
  %s6 = scalar_select 0, %s5, %s3
  $region1: #{tpu_custom_call.1} parent=0
    #allocation2 [shape = 'u8[16384]{0}', space=vmem, size = 0x4000, scoped, tag = 'input window, operand 0, single buffered']
    #allocation3 [shape = 's32[1]{0}', space=sflag, size = 0x4, scoped, tag = 'scoped memory for tpu_custom_call.1']
    #allocation4 [shape = 's32[1]{0}', space=sflag, size = 0x4, scoped, tag = 'scoped memory for tpu_custom_call.1']
    #allocation5 [shape = 'u8[16384]{0}', space=vmem, size = 0x4000, scoped, tag = 'input window, operand 1, single buffered']
    #allocation6 [shape = 's32[1]{0}', space=sflag, size = 0x4, scoped, tag = 'scoped memory for tpu_custom_call.1']
    #allocation7 [shape = 'u8[1536]{0}', space=vmem, size = 0x800, scoped, tag = 'output window, operand 0, single buffered']
    %7 = vsyncpa [#allocation3], 0
    %8 = vsyncpa [#allocation6], 0
    %9 = vsyncpa [#allocation4], 0
    // Predicated region
    $region2: #{tpu_custom_call.1} parent=1 // pred_check
      _
    $region3: #{tpu_custom_call.1} parent=1 // pred_check_branch
      %11 = sbr.rel (0) target = $region5
    $region4: #{tpu_custom_call.1} parent=1 // pred_region
      %13 = vsyncadd [#allocation3], 0
      %s14 = sshll.u32 %s0, 4
      %s15 = int_to_ptr.hbm [resolvable:$true] %s14
      %s16 = sshll.u32 [#allocation2], 4
      %s17 = int_to_ptr.vmem [resolvable:$true] %s16
      %22 = dma.hbm_to_vmem [thread:$0]  %s15, 512, %s17, [#allocation3], 128, 128, 8
    $region5: #{tpu_custom_call.1} parent=1 // pred_fallthru
      _
    // Predicated region
    $region6: #{tpu_custom_call.1} parent=1 // pred_check
      _
    $region7: #{tpu_custom_call.1} parent=1 // pred_check_branch
      %24 = sbr.rel (0) target = $region9
    $region8: #{tpu_custom_call.1} parent=1 // pred_region
      %26 = vsyncadd [#allocation6], 0
      %s27 = sshll.u32 %s1, 4
      %s28 = int_to_ptr.hbm [resolvable:$true] %s27
      %s29 = sshll.u32 [#allocation5], 4
      %s30 = int_to_ptr.vmem [resolvable:$true] %s29
      %35 = dma.hbm_to_vmem [thread:$0]  %s28, 512, %s30, [#allocation6], 128, 128, 8
    $region9: #{tpu_custom_call.1} parent=1 // pred_fallthru
      _
    // Predicated region
    $region10: #{tpu_custom_call.1} parent=1 // pred_check
      _
    $region11: #{tpu_custom_call.1} parent=1 // pred_check_branch
      %37 = sbr.rel (0) target = $region13
    $region12: #{tpu_custom_call.1} parent=1 // pred_region
      %39 = dma.done [#allocation3], 512
    $region13: #{tpu_custom_call.1} parent=1 // pred_fallthru
      _
    // Predicated region
    $region14: #{tpu_custom_call.1} parent=1 // pred_check
      _
    $region15: #{tpu_custom_call.1} parent=1 // pred_check_branch
      %41 = sbr.rel (0) target = $region17
    $region16: #{tpu_custom_call.1} parent=1 // pred_region
      %43 = dma.done [#allocation6], 512
    $region17: #{tpu_custom_call.1} parent=1 // pred_fallthru
      _
    %v44 = vld [vmem:[#allocation2] sm:$0xff]
    %v45 = vld [vmem:[#allocation2 + $0x8] sm:$0xff]
    %v46 = vld [vmem:[#allocation2 + $0x10] sm:$0xff]
    %v47 = vld [vmem:[#allocation2 + $0x18] sm:$0xff]
    %v48 = vxor.u32 %v44, 2147483648
    %v49 = vxor.u32 %v45, 2147483648
    %v50 = vxor.u32 %v46, 2147483648
    %v51 = vxor.u32 %v47, 2147483648
    %v52 = vmul.f32 %v48, 1.442695
    %v53 = vpow.pop %v52
    %v54 = vmul.f32 %v49, 1.442695
    %v55 = vpow.pop %v54
    %v56 = vmul.f32 %v50, 1.442695
    %v57 = vpow.pop %v56
    %v58 = vmul.f32 %v51, 1.442695
    %v59 = vpow.pop %v58
    %v60 = vadd.f32 %v53, 1.0
    %v61 = vadd.f32 %v55, 1.0
    %v62 = vadd.f32 %v57, 1.0
    %v63 = vadd.f32 %v59, 1.0
    %v64 = vrcp.pop %v60
    %v65 = vmul.f32 %v60, %v64
    %v66 = vsub.f32 1.0, %v65
    %v67 = vmul.f32 %v64, %v66
    %v68 = vadd.f32 %v64, %v67
    %vm69 = vweird.f32 %v60
    %vm70 = vweird.f32 %v64
    %vm71 = vmor %vm69, %vm70
    %v72 = vsel %vm71, %v64, %v68
    %v73 = vand.u32 2147483647, %v60
    %vm74 = vcmp.eq.f32.partialorder %v73, 8.507059e+37
    %v75 = vand.u32 %v60, 2147483648
    %v76 = vor.u32 1.1754944e-38, %v75
    %v77 = vsel %vm74, %v76, %v72
    %v78 = vmul.f32 1.0, %v77
    %v79 = vrcp.pop %v61
    %v80 = vmul.f32 %v61, %v79
    %v81 = vsub.f32 1.0, %v80
    %v82 = vmul.f32 %v79, %v81
    %v83 = vadd.f32 %v79, %v82
    %vm84 = vweird.f32 %v61
    %vm85 = vweird.f32 %v79
    %vm86 = vmor %vm84, %vm85
    %v87 = vsel %vm86, %v79, %v83
    %v88 = vand.u32 2147483647, %v61
    %vm89 = vcmp.eq.f32.partialorder %v88, 8.507059e+37
    %v90 = vand.u32 %v61, 2147483648
    %v91 = vor.u32 1.1754944e-38, %v90
    %v92 = vsel %vm89, %v91, %v87
    %v93 = vmul.f32 1.0, %v92
    %v94 = vrcp.pop %v62
    %v95 = vmul.f32 %v62, %v94
    %v96 = vsub.f32 1.0, %v95
    %v97 = vmul.f32 %v94, %v96
    %v98 = vadd.f32 %v94, %v97
    %vm99 = vweird.f32 %v62
    %vm100 = vweird.f32 %v94
    %vm101 = vmor %vm99, %vm100
    %v102 = vsel %vm101, %v94, %v98
    %v103 = vand.u32 2147483647, %v62
    %vm104 = vcmp.eq.f32.partialorder %v103, 8.507059e+37
    %v105 = vand.u32 %v62, 2147483648
    %v106 = vor.u32 1.1754944e-38, %v105
    %v107 = vsel %vm104, %v106, %v102
    %v108 = vmul.f32 1.0, %v107
    %v109 = vrcp.pop %v63
    %v110 = vmul.f32 %v63, %v109
    %v111 = vsub.f32 1.0, %v110
    %v112 = vmul.f32 %v109, %v111
    %v113 = vadd.f32 %v109, %v112
    %vm114 = vweird.f32 %v63
    %vm115 = vweird.f32 %v109
    %vm116 = vmor %vm114, %vm115
    %v117 = vsel %vm116, %v109, %v113
    %v118 = vand.u32 2147483647, %v63
    %vm119 = vcmp.eq.f32.partialorder %v118, 8.507059e+37
    %v120 = vand.u32 %v63, 2147483648
    %v121 = vor.u32 1.1754944e-38, %v120
    %v122 = vsel %vm119, %v121, %v117
    %v123 = vmul.f32 1.0, %v122
    %v124 = vld [vmem:[#allocation5] sm:$0xff]
    %v125 = vld [vmem:[#allocation5 + $0x8] sm:$0xff]
    %v126 = vld [vmem:[#allocation5 + $0x10] sm:$0xff]
    %v127 = vld [vmem:[#allocation5 + $0x18] sm:$0xff]
    %p128 = scmp.eq.s32.totalorder 0, 0
    %p129 = scmp.ne.s32.totalorder 0, 0
    // Predicated region
    $region18: #{tpu_custom_call.1} parent=1 // pred_check
      %p130 = pneg %p129
    $region19: #{tpu_custom_call.1} parent=1 // pred_check_branch
      %132 = sbr.rel (%p130) target = $region21
    $region20: #{tpu_custom_call.1} parent=1 // pred_region
      %v133 = vmul.f32 %v78, %v124
      %v134 = vmul.f32 %v93, %v125
      %v135 = vmul.f32 %v108, %v126
      %v136 = vmul.f32 %v123, %v127
      %v137 = vadd.f32 %v133, %v134
      %v138 = vadd.f32 %v137, %v135
      %v139 = vadd.f32 %v138, %v136
      %v140 = vrot.slane %v139, 4
      %v141 = vadd.f32 %v139, %v140
      %v142 = vrot.slane %v141, 2
      %v143 = vadd.f32 %v141, %v142
      %v144 = vrot.slane %v143, 1
      %v145 = vadd.f32 %v143, %v144
      %v146 = vlaneseq
      %vm147 = vcmp.ge.s32.totalorder %v146, 0
      %vm148 = vcmp.lt.s32.totalorder %v146, 128
      %vm149 = vmand %vm147, %vm148
      %150 = vst.msk [vmem:[#allocation7] sm:$0x1] %vm149, %v145
      %v151 = vadd.f32 %v78, %v93
      %v152 = vadd.f32 %v151, %v108
      %v153 = vadd.f32 %v152, %v123
      %v154 = vrot.slane %v153, 4
      %v155 = vadd.f32 %v153, %v154
      %v156 = vrot.slane %v155, 2
      %v157 = vadd.f32 %v155, %v156
      %v158 = vrot.slane %v157, 1
      %v159 = vadd.f32 %v157, %v158
      %160 = vst.msk [vmem:[#allocation7 + $0x1] sm:$0x1] %vm149, %v159
      %v161 = vadd.f32 %v124, %v125
      %v162 = vadd.f32 %v161, %v126
      %v163 = vadd.f32 %v162, %v127
      %v164 = vrot.slane %v163, 4
      %v165 = vadd.f32 %v163, %v164
      %v166 = vrot.slane %v165, 2
      %v167 = vadd.f32 %v165, %v166
      %v168 = vrot.slane %v167, 1
      %v169 = vadd.f32 %v167, %v168
      %170 = vst.msk [vmem:[#allocation7 + $0x2] sm:$0x1] %vm149, %v169
    $region21: #{tpu_custom_call.1} parent=1 // pred_fallthru
      _
    // Predicated region
    $region22: #{tpu_custom_call.1} parent=1 // pred_check
      %p171 = pneg %p128
    $region23: #{tpu_custom_call.1} parent=1 // pred_check_branch
      %173 = sbr.rel (%p171) target = $region25
    $region24: #{tpu_custom_call.1} parent=1 // pred_region
      %v174 = vlaneseq
      %v175 = vshrl.u32 %v174, 7
      %v176 = vadd.s32 %v175, 8
      %v177 = vadd.s32 %v175, 16
      %v178 = vadd.s32 %v175, 24
      %v179 = vlaneseq
      %v180 = vand.u32 %v179, 127
      %v181 = vmul.u32 %v175, 128
      %v182 = vmul.u32 %v176, 128
      %v183 = vmul.u32 %v177, 128
      %v184 = vmul.u32 %v178, 128
      %v185 = vadd.s32 %v181, %v180
      %v186 = vadd.s32 %v182, %v180
      %v187 = vadd.s32 %v183, %v180
      %v188 = vadd.s32 %v184, %v180
      %vm189 = vcmp.lt.s32.totalorder %v185, 512
      %vm190 = vcmp.lt.s32.totalorder %v186, 512
      %vm191 = vcmp.lt.s32.totalorder %v187, 512
      %vm192 = vcmp.lt.s32.totalorder %v188, 512
      %v193 = vsel %vm189, %v78, 0.0
      %v194 = vsel %vm190, %v93, 0.0
      %v195 = vsel %vm191, %v108, 0.0
      %v196 = vsel %vm192, %v123, 0.0
      %v197 = vsel %vm189, %v124, 0.0
      %v198 = vsel %vm190, %v125, 0.0
      %v199 = vsel %vm191, %v126, 0.0
      %v200 = vsel %vm192, %v127, 0.0
      %v201 = vmul.f32 %v193, %v197
      %v202 = vmul.f32 %v194, %v198
      %v203 = vmul.f32 %v195, %v199
      %v204 = vmul.f32 %v196, %v200
      %v205 = vadd.f32 %v201, %v202
      %v206 = vadd.f32 %v205, %v203
      %v207 = vadd.f32 %v206, %v204
      %v208 = vrot.slane %v207, 4
      %v209 = vadd.f32 %v207, %v208
      %v210 = vrot.slane %v209, 2
      %v211 = vadd.f32 %v209, %v210
      %v212 = vrot.slane %v211, 1
      %v213 = vadd.f32 %v211, %v212
      %v214 = vlaneseq
      %vm215 = vcmp.ge.s32.totalorder %v214, 0
      %vm216 = vcmp.lt.s32.totalorder %v214, 128
      %vm217 = vmand %vm215, %vm216
      %218 = vst.msk [vmem:[#allocation7] sm:$0x1] %vm217, %v213
      %v219 = vadd.f32 %v193, %v194
      %v220 = vadd.f32 %v219, %v195
      %v221 = vadd.f32 %v220, %v196
      %v222 = vrot.slane %v221, 4
      %v223 = vadd.f32 %v221, %v222
      %v224 = vrot.slane %v223, 2
      %v225 = vadd.f32 %v223, %v224
      %v226 = vrot.slane %v225, 1
      %v227 = vadd.f32 %v225, %v226
      %228 = vst.msk [vmem:[#allocation7 + $0x1] sm:$0x1] %vm217, %v227
      %v229 = vadd.f32 %v197, %v198
      %v230 = vadd.f32 %v229, %v199
      %v231 = vadd.f32 %v230, %v200
      %v232 = vrot.slane %v231, 4
      %v233 = vadd.f32 %v231, %v232
      %v234 = vrot.slane %v233, 2
      %v235 = vadd.f32 %v233, %v234
      %v236 = vrot.slane %v235, 1
      %v237 = vadd.f32 %v235, %v236
      %238 = vst.msk [vmem:[#allocation7 + $0x2] sm:$0x1] %vm217, %v237
    $region25: #{tpu_custom_call.1} parent=1 // pred_fallthru
      _
    // Predicated region
    $region26: #{tpu_custom_call.1} parent=1 // pred_check
      _
    $region27: #{tpu_custom_call.1} parent=1 // pred_check_branch
      %240 = sbr.rel (0) target = $region29
    $region28: #{tpu_custom_call.1} parent=1 // pred_region
      %242 = vsyncadd [#allocation4], 0
      %s244 = sshll.u32 [#allocation7], 4
      %s245 = int_to_ptr.vmem [resolvable:$true] %s244
      %s246 = sshll.u32 %s2, 4
      %s247 = int_to_ptr.hbm [resolvable:$true] %s246
      %249 = dma.vmem_to_hbm [thread:$0]  %s245, 48, %s247, [#allocation4]
    $region29: #{tpu_custom_call.1} parent=1 // pred_fallthru
      _
    // Predicated region
    $region30: #{tpu_custom_call.1} parent=1 // pred_check
      _
    $region31: #{tpu_custom_call.1} parent=1 // pred_check_branch
      %251 = sbr.rel (0) target = $region33
    $region32: #{tpu_custom_call.1} parent=1 // pred_region
      %253 = dma.done [#allocation4], 48
    $region33: #{tpu_custom_call.1} parent=1 // pred_fallthru
      _
    %254 = vsyncpa [#allocation3], 1
    %255 = vsyncpa [#allocation6], 1
    %256 = vsyncpa [#allocation4], 1

</llo_original>
